<compile_context>
chip_gen: v7x
topology: tpu7x:2x2x1
jax: 0.10.0
libtpu: 0.0.40
codegen_flags: <defaults>
</compile_context>

<pallas_src>
from functools import partial

import jax
import jax.numpy as jnp
from jax import lax
from jax.experimental import pallas as pl
from jax.experimental.pallas import tpu as pltpu


def _round_up(x, m):
    return ((x + m - 1) // m) * m


# ------------------------------ Pallas kernel ------------------------------ #
def conv_gemm_kernel(p_ref, w_ref, b_ref, o_ref, acc_ref):
    # p_ref: (tm, tk) bf16   w_ref: (tk, tn) bf16   b_ref: (1, tn) f32
    # o_ref: (tm, tn) f32    acc_ref: (tm, tn) f32 scratch
    @pl.when(pl.program_id(2) == 0)
    def _():
        acc_ref[...] = jnp.zeros_like(acc_ref)

    acc_ref[...] += jnp.dot(p_ref[...], w_ref[...],
                            preferred_element_type=jnp.float32)

    @pl.when(pl.program_id(2) == pl.num_programs(2) - 1)
    def _():
        o_ref[...] = (acc_ref[...] + b_ref[...]).astype(o_ref.dtype)


def conv_gemm(patches, w_mat_pad, bias_row_pad):
    """patches: (M, K) bf16.  w_mat_pad: (K_pad, OC_pad) bf16 (zero padded).
    bias_row_pad: (1, OC_pad) f32.  Returns (M_pad, OC_pad) f32."""
    M, K = patches.shape
    K_pad, OC_pad = w_mat_pad.shape

    # Tile selection: lane/MXU aligned, modest VMEM footprint.
    tn = 256 if OC_pad % 256 == 0 else 128
    tk = 256 if K_pad % 256 == 0 else 128
    if M <= 1024:
        # Single M-tile, no row padding (sublane alignment only needs x8).
        tm = _round_up(M, 8)
        M_pad = tm
    else:
        tm = 512
        M_pad = _round_up(M, tm)

    if M_pad != M or K_pad != K:
        patches = jnp.pad(patches, ((0, M_pad - M), (0, K_pad - K)))

    grid = (M_pad // tm, OC_pad // tn, K_pad // tk)

    flops = 2 * M_pad * K_pad * OC_pad
    bytes_accessed = (M_pad * K_pad * 2 + K_pad * OC_pad * 2
                      + M_pad * OC_pad * 4 + OC_pad * 4)

    return pl.pallas_call(
        conv_gemm_kernel,
        out_shape=jax.ShapeDtypeStruct((M_pad, OC_pad), jnp.float32),
        grid_spec=pltpu.PrefetchScalarGridSpec(
            num_scalar_prefetch=0,
            grid=grid,
            in_specs=[
                pl.BlockSpec((tm, tk), lambda i, j, k: (i, k)),
                pl.BlockSpec((tk, tn), lambda i, j, k: (k, j)),
                pl.BlockSpec((1, tn), lambda i, j, k: (0, j)),
            ],
            out_specs=pl.BlockSpec((tm, tn), lambda i, j, k: (i, j)),
            scratch_shapes=[pltpu.VMEM((tm, tn), jnp.float32)],
        ),
        compiler_params=pltpu.CompilerParams(
            dimension_semantics=("parallel", "parallel", "arbitrary"),
        ),
        cost_estimate=pl.CostEstimate(flops=flops, transcendentals=0,
                                      bytes_accessed=bytes_accessed),
    )(patches, w_mat_pad, bias_row_pad)


# ------------------------------ JAX glue ----------------------------------- #
def im2col_nchw(x, kh, kw, stride, padding):
    """x: (N, C, H, W) -> patches (N*OH*OW, C*KH*KW), plus (OH, OW)."""
    N, C, H, W = x.shape
    if padding > 0:
        x = jnp.pad(x, ((0, 0), (0, 0), (padding, padding), (padding, padding)))
    Hp, Wp = x.shape[2], x.shape[3]
    OH = (Hp - kh) // stride + 1
    OW = (Wp - kw) // stride + 1
    slabs = []
    for i in range(kh):
        for j in range(kw):
            slabs.append(x[:, :, i:i + stride * OH:stride, j:j + stride * OW:stride])
    # (KH*KW, N, C, OH, OW) -> (N, OH, OW, C, KH*KW) ; K flattens as c*KH*KW + i*KW + j
    p = jnp.stack(slabs, axis=0).transpose(1, 3, 4, 2, 0)
    return p.reshape(N * OH * OW, C * kh * kw), OH, OW


@partial(jax.jit, static_argnames=("out_channels", "kh", "kw", "stride", "padding"))
def conv2d_rf_forward(x, w_mat_pad, bias_row_pad, *, out_channels, kh, kw,
                      stride, padding):
    N, C, H, W = x.shape
    x_bf = x.astype(jnp.bfloat16)
    patches, OH, OW = im2col_nchw(x_bf, kh, kw, stride, padding)
    out_rows = conv_gemm(patches, w_mat_pad, bias_row_pad)      # (M_pad, OC_pad)
    M = N * OH * OW
    out_rows = out_rows[:M, :out_channels]                      # drop padding
    out = out_rows.reshape(N, OH, OW, out_channels)
    return out.transpose(0, 3, 1, 2)                            # NCHW


class Conv2dRF:
    """Eval-mode Conv2d_RF: forward(x) == Conv2d(x)."""

    def __init__(self, in_channels, out_channels, kernel_size=3, stride=1,
                 padding=0, bias=True, division_rate=0.0, key=None):
        self.in_channels = in_channels
        self.out_channels = out_channels
        self.kernel_size = kernel_size
        self.stride = stride
        self.padding = padding
        self.division_rate = division_rate

        key = jax.random.PRNGKey(0) if key is None else key
        kw_, kb_ = jax.random.split(key)
        fan_in = in_channels * kernel_size * kernel_size
        bound = 1.0 / (fan_in ** 0.5)
        # PyTorch Conv2d weight layout: (OC, IC, KH, KW)
        self.weight = jax.random.uniform(
            kw_, (out_channels, in_channels, kernel_size, kernel_size),
            minval=-bound, maxval=bound, dtype=jnp.float32)
        if bias:
            self.bias = jax.random.uniform(
                kb_, (out_channels,), minval=-bound, maxval=bound,
                dtype=jnp.float32)
        else:
            self.bias = jnp.zeros((out_channels,), jnp.float32)

        # Hoisted GEMM-side weight prep: (OC, C, KH, KW) -> (K, OC), bf16,
        # zero-padded to lane/MXU-aligned (K_pad, OC_pad).
        K = in_channels * kernel_size * kernel_size
        K_pad = _round_up(K, 128)
        OC_pad = _round_up(out_channels, 128)
        w_mat = self.weight.reshape(out_channels, K).T.astype(jnp.bfloat16)
        self.w_mat_pad = jnp.pad(
            w_mat, ((0, K_pad - K), (0, OC_pad - out_channels)))
        self.bias_row_pad = jnp.pad(
            self.bias.reshape(1, out_channels).astype(jnp.float32),
            ((0, 0), (0, OC_pad - out_channels)))

    def __call__(self, x):
        return conv2d_rf_forward(
            x, self.w_mat_pad, self.bias_row_pad,
            out_channels=self.out_channels,
            kh=self.kernel_size, kw=self.kernel_size,
            stride=self.stride, padding=self.padding)


# ------------------------------ main --------------------------------------- #
if __name__ == "__main__":
    key = jax.random.PRNGKey(0)
    kx, kp = jax.random.split(key)

    N, C, H, W = 2, 4, 16, 16
    OC = 8
    x = jax.random.normal(kx, (N, C, H, W), dtype=jnp.float32)

    layer = Conv2dRF(in_channels=C, out_channels=OC, kernel_size=3,
                     stride=1, padding=0, bias=True, division_rate=0.0, key=kp)

    out = layer(x)
    out = jax.block_until_ready(out)

    # Reference: XLA conv on the same bf16-rounded inputs (f32 accumulation),
    # so the comparison isolates kernel correctness from bf16 input rounding.
    x_bf = x.astype(jnp.bfloat16).astype(jnp.float32)
    w_bf = layer.weight.astype(jnp.bfloat16).astype(jnp.float32)
    ref = lax.conv_general_dilated(
        x_bf, w_bf, window_strides=(1, 1), padding="VALID",
        dimension_numbers=("NCHW", "OIHW", "NCHW"),
    ) + layer.bias.reshape(1, OC, 1, 1)

    assert out.shape == (N, OC, H - 2, W - 2), out.shape
    assert jnp.allclose(out, ref, atol=2e-2, rtol=2e-2), "mismatch vs reference conv"

    print("KERNEL_OK")
</pallas_src>

<mosaic_0001>
module attributes {stable_mosaic.version = 11 : i64} {
  func.func @conv_gemm_kernel(%arg0: i32, %arg1: i32, %arg2: i32, %arg3: memref<392x128xbf16, #tpu.memory_space<vmem>>, %arg4: memref<128x128xbf16, #tpu.memory_space<vmem>>, %arg5: memref<1x128xf32, #tpu.memory_space<vmem>>, %arg6: memref<392x128xf32, #tpu.memory_space<vmem>>, %arg7: memref<392x128xf32, #tpu.memory_space<vmem>>) attributes {dimension_semantics = [#tpu.dimension_semantics<parallel>, #tpu.dimension_semantics<parallel>, #tpu.dimension_semantics<arbitrary>], iteration_bounds = array<i64: 1, 1, 1>, scalar_prefetch = 0 : i64, scratch_operands = 1 : i64, tpu.core_type = #tpu.core_type<tc>, window_params = [{transform_indices = @transform_0, window_bounds = array<i64: 392, 128>}, {transform_indices = @transform_1, window_bounds = array<i64: 128, 128>}, {transform_indices = @transform_2, window_bounds = array<i64: 1, 128>}, {transform_indices = @transform_3, window_bounds = array<i64: 392, 128>}]} {
    %c0_i32 = arith.constant 0 : i32
    %0 = arith.cmpi eq, %arg2, %c0_i32 : i32
    %1 = arith.extui %0 : i1 to i32
    %c0_i32_0 = arith.constant 0 : i32
    %2 = arith.cmpi ne, %1, %c0_i32_0 : i32
    scf.if %2 {
      %cst_10 = arith.constant 0.000000e+00 : f32
      %12 = vector.broadcast %cst_10 : f32 to vector<392x128xf32>
      %c0_11 = arith.constant 0 : index
      %c0_12 = arith.constant 0 : index
      %13 = vector.load %arg7[%c0_11, %c0_12] : memref<392x128xf32, #tpu.memory_space<vmem>>, vector<392x128xf32>
      tpu.vector_store %arg7[%c0_11, %c0_12], %12 {strides = array<i32>} : memref<392x128xf32, #tpu.memory_space<vmem>>, vector<392x128xf32>,
    } else {
    }
    %c0 = arith.constant 0 : index
    %c0_1 = arith.constant 0 : index
    %3 = vector.load %arg7[%c0, %c0_1] : memref<392x128xf32, #tpu.memory_space<vmem>>, vector<392x128xf32>
    %c0_2 = arith.constant 0 : index
    %c0_3 = arith.constant 0 : index
    %4 = vector.load %arg3[%c0_2, %c0_3] : memref<392x128xbf16, #tpu.memory_space<vmem>>, vector<392x128xbf16>
    %c0_4 = arith.constant 0 : index
    %c0_5 = arith.constant 0 : index
    %5 = vector.load %arg4[%c0_4, %c0_5] : memref<128x128xbf16, #tpu.memory_space<vmem>>, vector<128x128xbf16>
    %cst = arith.constant dense<0.000000e+00> : vector<392x128xf32>
    %6 = tpu.matmul %4, %5, %cst {dimension_numbers = #tpu.dot_dimension_numbers<[1], [0], [0], [1], [0, 0, 1, 1], [], []>} : vector<392x128xbf16>, vector<128x128xbf16>, vector<392x128xf32> -> vector<392x128xf32>
    %7 = arith.addf %3, %6 : vector<392x128xf32>
    %c0_6 = arith.constant 0 : index
    %c0_7 = arith.constant 0 : index
    %8 = vector.load %arg7[%c0_6, %c0_7] : memref<392x128xf32, #tpu.memory_space<vmem>>, vector<392x128xf32>
    tpu.vector_store %arg7[%c0_6, %c0_7], %7 {strides = array<i32>} : memref<392x128xf32, #tpu.memory_space<vmem>>, vector<392x128xf32>,
    %c0_i32_8 = arith.constant 0 : i32
    %9 = arith.cmpi eq, %arg2, %c0_i32_8 : i32
    %10 = arith.extui %9 : i1 to i32
    %c0_i32_9 = arith.constant 0 : i32
    %11 = arith.cmpi ne, %10, %c0_i32_9 : i32
    scf.if %11 {
      %c0_10 = arith.constant 0 : index
      %c0_11 = arith.constant 0 : index
      %12 = vector.load %arg7[%c0_10, %c0_11] : memref<392x128xf32, #tpu.memory_space<vmem>>, vector<392x128xf32>
      %c0_12 = arith.constant 0 : index
      %c0_13 = arith.constant 0 : index
      %13 = vector.load %arg5[%c0_12, %c0_13] : memref<1x128xf32, #tpu.memory_space<vmem>>, vector<1x128xf32>
      %14 = vector.broadcast %13 : vector<1x128xf32> to vector<392x128xf32>
      %15 = arith.addf %12, %14 : vector<392x128xf32>
      %c0_14 = arith.constant 0 : index
      %c0_15 = arith.constant 0 : index
      %16 = vector.load %arg6[%c0_14, %c0_15] : memref<392x128xf32, #tpu.memory_space<vmem>>, vector<392x128xf32>
      tpu.vector_store %arg6[%c0_14, %c0_15], %15 {strides = array<i32>} : memref<392x128xf32, #tpu.memory_space<vmem>>, vector<392x128xf32>,
    } else {
    }
    return
  }
  func.func @transform_0(%arg0: i32, %arg1: i32, %arg2: i32) -> (i32, i32) {
    %c0_i32 = arith.constant 0 : i32
    return %arg0, %arg2 : i32, i32
  }
  func.func @transform_1(%arg0: i32, %arg1: i32, %arg2: i32) -> (i32, i32) {
    %c0_i32 = arith.constant 0 : i32
    return %arg2, %arg1 : i32, i32
  }
  func.func @transform_2(%arg0: i32, %arg1: i32, %arg2: i32) -> (i32, i32) {
    %c0_i32 = arith.constant 0 : i32
    %c0_i32_0 = arith.constant 0 : i32
    return %c0_i32, %arg1 : i32, i32
  }
  func.func @transform_3(%arg0: i32, %arg1: i32, %arg2: i32) -> (i32, i32) {
    %c0_i32 = arith.constant 0 : i32
    return %arg0, %arg1 : i32, i32
  }
}

</mosaic_0001>

<llo_original>
// kernel: conv2d_rf_forward.1
$region0: #{conv2d_rf_forward.1}
  #allocation0 [shape = 'u32[]', space=smem, size = 0x4, offset = 0x4, fixed_abs, tag = 'smem constant byte address 0x4 - core index']
  #allocation1 [shape = 'u32[144,128]{1,0:T(1,128)}', space=vmem, size = 0x12000, scoped, tag = 'internal scratch']
  #allocation2 [shape = 'f32[392,128]{1,0:T(8,128)}', space=vmem, size = 0x31000, scoped, tag = 'scratch operand']
  %s0 = inlined_call_operand.vmem [shape: bf16[392,128], index: 0, kind: input, shape index: {}]
  %s1 = inlined_call_operand.vmem [shape: bf16[128,128], index: 1, kind: input, shape index: {}]
  %s2 = inlined_call_operand.vmem [shape: f32[1,128], index: 2, kind: input, shape index: {}]
  %s3 = inlined_call_operand.vmem [shape: f32[392,128], index: 3, kind: output, shape index: {}]
  %s4 = sld [smem:[#allocation0]]
  $region30: #{conv2d_rf_forward.1} parent=0
    _
  %s6 = ssub.s32 1, %s4
  %s7 = scalar_select 0, %s6, %s4
  // Predicated region
  $region2: #{conv2d_rf_forward.1} parent=0 // pred_check
    _
  $region3: #{conv2d_rf_forward.1} parent=0 // pred_check_branch
    %9 = sbr.rel (0) target = $region5
  $region4: #{conv2d_rf_forward.1} parent=0 // pred_region
    _
  $region5: #{conv2d_rf_forward.1} parent=0 // pred_fallthru
    _
  // Predicated region
  $region6: #{conv2d_rf_forward.1} parent=0 // pred_check
    _
  $region7: #{conv2d_rf_forward.1} parent=0 // pred_check_branch
    %11 = sbr.rel (0) target = $region9
  $region8: #{conv2d_rf_forward.1} parent=0 // pred_region
    _
  $region9: #{conv2d_rf_forward.1} parent=0 // pred_fallthru
    _
  // Predicated region
  $region10: #{conv2d_rf_forward.1} parent=0 // pred_check
    _
  $region11: #{conv2d_rf_forward.1} parent=0 // pred_check_branch
    %13 = sbr.rel (0) target = $region13
  $region12: #{conv2d_rf_forward.1} parent=0 // pred_region
    _
  $region13: #{conv2d_rf_forward.1} parent=0 // pred_fallthru
    _
  %p15 = scmp.eq.s32.totalorder 0, 0
  // Predicated region
  $region14: #{conv2d_rf_forward.1} parent=0 // pred_check
    %p16 = pneg %p15
  $region15: #{conv2d_rf_forward.1} parent=0 // pred_check_branch
    %18 = sbr.rel (%p16) target = $region17
  $region16: #{conv2d_rf_forward.1} parent=0 // pred_region
    %19 = vst [vmem:[#allocation2] sm:$0xff] 0.0
    %20 = vst [vmem:[#allocation2 + $0x8] sm:$0xff] 0.0
    %21 = vst [vmem:[#allocation2 + $0x10] sm:$0xff] 0.0
    %22 = vst [vmem:[#allocation2 + $0x18] sm:$0xff] 0.0
    %23 = vst [vmem:[#allocation2 + $0x20] sm:$0xff] 0.0
    %24 = vst [vmem:[#allocation2 + $0x28] sm:$0xff] 0.0
    %25 = vst [vmem:[#allocation2 + $0x30] sm:$0xff] 0.0
    %26 = vst [vmem:[#allocation2 + $0x38] sm:$0xff] 0.0
    %27 = vst [vmem:[#allocation2 + $0x40] sm:$0xff] 0.0
    %28 = vst [vmem:[#allocation2 + $0x48] sm:$0xff] 0.0
    %29 = vst [vmem:[#allocation2 + $0x50] sm:$0xff] 0.0
    %30 = vst [vmem:[#allocation2 + $0x58] sm:$0xff] 0.0
    %31 = vst [vmem:[#allocation2 + $0x60] sm:$0xff] 0.0
    %32 = vst [vmem:[#allocation2 + $0x68] sm:$0xff] 0.0
    %33 = vst [vmem:[#allocation2 + $0x70] sm:$0xff] 0.0
    %34 = vst [vmem:[#allocation2 + $0x78] sm:$0xff] 0.0
    %35 = vst [vmem:[#allocation2 + $0x80] sm:$0xff] 0.0
    %36 = vst [vmem:[#allocation2 + $0x88] sm:$0xff] 0.0
    %37 = vst [vmem:[#allocation2 + $0x90] sm:$0xff] 0.0
    %38 = vst [vmem:[#allocation2 + $0x98] sm:$0xff] 0.0
    %39 = vst [vmem:[#allocation2 + $0xa0] sm:$0xff] 0.0
    %40 = vst [vmem:[#allocation2 + $0xa8] sm:$0xff] 0.0
    %41 = vst [vmem:[#allocation2 + $0xb0] sm:$0xff] 0.0
    %42 = vst [vmem:[#allocation2 + $0xb8] sm:$0xff] 0.0
    %43 = vst [vmem:[#allocation2 + $0xc0] sm:$0xff] 0.0
    %44 = vst [vmem:[#allocation2 + $0xc8] sm:$0xff] 0.0
    %45 = vst [vmem:[#allocation2 + $0xd0] sm:$0xff] 0.0
    %46 = vst [vmem:[#allocation2 + $0xd8] sm:$0xff] 0.0
    %47 = vst [vmem:[#allocation2 + $0xe0] sm:$0xff] 0.0
    %48 = vst [vmem:[#allocation2 + $0xe8] sm:$0xff] 0.0
    %49 = vst [vmem:[#allocation2 + $0xf0] sm:$0xff] 0.0
    %50 = vst [vmem:[#allocation2 + $0xf8] sm:$0xff] 0.0
    %51 = vst [vmem:[#allocation2 + $0x100] sm:$0xff] 0.0
    %52 = vst [vmem:[#allocation2 + $0x108] sm:$0xff] 0.0
    %53 = vst [vmem:[#allocation2 + $0x110] sm:$0xff] 0.0
    %54 = vst [vmem:[#allocation2 + $0x118] sm:$0xff] 0.0
    %55 = vst [vmem:[#allocation2 + $0x120] sm:$0xff] 0.0
    %56 = vst [vmem:[#allocation2 + $0x128] sm:$0xff] 0.0
    %57 = vst [vmem:[#allocation2 + $0x130] sm:$0xff] 0.0
    %58 = vst [vmem:[#allocation2 + $0x138] sm:$0xff] 0.0
    %59 = vst [vmem:[#allocation2 + $0x140] sm:$0xff] 0.0
    %60 = vst [vmem:[#allocation2 + $0x148] sm:$0xff] 0.0
    %61 = vst [vmem:[#allocation2 + $0x150] sm:$0xff] 0.0
    %62 = vst [vmem:[#allocation2 + $0x158] sm:$0xff] 0.0
    %63 = vst [vmem:[#allocation2 + $0x160] sm:$0xff] 0.0
    %64 = vst [vmem:[#allocation2 + $0x168] sm:$0xff] 0.0
    %65 = vst [vmem:[#allocation2 + $0x170] sm:$0xff] 0.0
    %66 = vst [vmem:[#allocation2 + $0x178] sm:$0xff] 0.0
    %67 = vst [vmem:[#allocation2 + $0x180] sm:$0xff] 0.0
  $region17: #{conv2d_rf_forward.1} parent=0 // pred_fallthru
    _
  %v68 = vld [vmem:[#allocation2] sm:$0xff]
  %v69 = vld [vmem:[#allocation2 + $0x8] sm:$0xff]
  %v70 = vld [vmem:[#allocation2 + $0x10] sm:$0xff]
  %v71 = vld [vmem:[#allocation2 + $0x18] sm:$0xff]
  %v72 = vld [vmem:[#allocation2 + $0x20] sm:$0xff]
  %v73 = vld [vmem:[#allocation2 + $0x28] sm:$0xff]
  %v74 = vld [vmem:[#allocation2 + $0x30] sm:$0xff]
  %v75 = vld [vmem:[#allocation2 + $0x38] sm:$0xff]
  %v76 = vld [vmem:[#allocation2 + $0x40] sm:$0xff]
  %v77 = vld [vmem:[#allocation2 + $0x48] sm:$0xff]
  %v78 = vld [vmem:[#allocation2 + $0x50] sm:$0xff]
  %v79 = vld [vmem:[#allocation2 + $0x58] sm:$0xff]
  %v80 = vld [vmem:[#allocation2 + $0x60] sm:$0xff]
  %v81 = vld [vmem:[#allocation2 + $0x68] sm:$0xff]
  %v82 = vld [vmem:[#allocation2 + $0x70] sm:$0xff]
  %v83 = vld [vmem:[#allocation2 + $0x78] sm:$0xff]
  %v84 = vld [vmem:[#allocation2 + $0x80] sm:$0xff]
  %v85 = vld [vmem:[#allocation2 + $0x88] sm:$0xff]
  %v86 = vld [vmem:[#allocation2 + $0x90] sm:$0xff]
  %v87 = vld [vmem:[#allocation2 + $0x98] sm:$0xff]
  %v88 = vld [vmem:[#allocation2 + $0xa0] sm:$0xff]
  %v89 = vld [vmem:[#allocation2 + $0xa8] sm:$0xff]
  %v90 = vld [vmem:[#allocation2 + $0xb0] sm:$0xff]
  %v91 = vld [vmem:[#allocation2 + $0xb8] sm:$0xff]
  %v92 = vld [vmem:[#allocation2 + $0xc0] sm:$0xff]
  %v93 = vld [vmem:[#allocation2 + $0xc8] sm:$0xff]
  %v94 = vld [vmem:[#allocation2 + $0xd0] sm:$0xff]
  %v95 = vld [vmem:[#allocation2 + $0xd8] sm:$0xff]
  %v96 = vld [vmem:[#allocation2 + $0xe0] sm:$0xff]
  %v97 = vld [vmem:[#allocation2 + $0xe8] sm:$0xff]
  %v98 = vld [vmem:[#allocation2 + $0xf0] sm:$0xff]
  %v99 = vld [vmem:[#allocation2 + $0xf8] sm:$0xff]
  %v100 = vld [vmem:[#allocation2 + $0x100] sm:$0xff]
  %v101 = vld [vmem:[#allocation2 + $0x108] sm:$0xff]
  %v102 = vld [vmem:[#allocation2 + $0x110] sm:$0xff]
  %v103 = vld [vmem:[#allocation2 + $0x118] sm:$0xff]
  %v104 = vld [vmem:[#allocation2 + $0x120] sm:$0xff]
  %v105 = vld [vmem:[#allocation2 + $0x128] sm:$0xff]
  %v106 = vld [vmem:[#allocation2 + $0x130] sm:$0xff]
  %v107 = vld [vmem:[#allocation2 + $0x138] sm:$0xff]
  %v108 = vld [vmem:[#allocation2 + $0x140] sm:$0xff]
  %v109 = vld [vmem:[#allocation2 + $0x148] sm:$0xff]
  %v110 = vld [vmem:[#allocation2 + $0x150] sm:$0xff]
  %v111 = vld [vmem:[#allocation2 + $0x158] sm:$0xff]
  %v112 = vld [vmem:[#allocation2 + $0x160] sm:$0xff]
  %v113 = vld [vmem:[#allocation2 + $0x168] sm:$0xff]
  %v114 = vld [vmem:[#allocation2 + $0x170] sm:$0xff]
  %v115 = vld [vmem:[#allocation2 + $0x178] sm:$0xff]
  %v116 = vld [vmem:[#allocation2 + $0x180] sm:$0xff]
  %v117 = vld [vmem:[%s0] sm:$0xf]
  %v118 = vld [vmem:[%s0 + $0x4] sm:$0xf]
  %v119 = vld [vmem:[%s0 + $0x8] sm:$0xf]
  %v120 = vld [vmem:[%s0 + $0xc] sm:$0xf]
  %v121 = vld [vmem:[%s0 + $0x10] sm:$0xf]
  %v122 = vld [vmem:[%s0 + $0x14] sm:$0xf]
  %v123 = vld [vmem:[%s0 + $0x18] sm:$0xf]
  %v124 = vld [vmem:[%s0 + $0x1c] sm:$0xf]
  %v125 = vld [vmem:[%s0 + $0x20] sm:$0xf]
  %v126 = vld [vmem:[%s0 + $0x24] sm:$0xf]
  %v127 = vld [vmem:[%s0 + $0x28] sm:$0xf]
  %v128 = vld [vmem:[%s0 + $0x2c] sm:$0xf]
  %v129 = vld [vmem:[%s0 + $0x30] sm:$0xf]
  %v130 = vld [vmem:[%s0 + $0x34] sm:$0xf]
  %v131 = vld [vmem:[%s0 + $0x38] sm:$0xf]
  %v132 = vld [vmem:[%s0 + $0x3c] sm:$0xf]
  %v133 = vld [vmem:[%s0 + $0x40] sm:$0xf]
  %v134 = vld [vmem:[%s0 + $0x44] sm:$0xf]
  %v135 = vld [vmem:[%s0 + $0x48] sm:$0xf]
  %v136 = vld [vmem:[%s0 + $0x4c] sm:$0xf]
  %v137 = vld [vmem:[%s0 + $0x50] sm:$0xf]
  %v138 = vld [vmem:[%s0 + $0x54] sm:$0xf]
  %v139 = vld [vmem:[%s0 + $0x58] sm:$0xf]
  %v140 = vld [vmem:[%s0 + $0x5c] sm:$0xf]
  %v141 = vld [vmem:[%s0 + $0x60] sm:$0xf]
  %v142 = vld [vmem:[%s0 + $0x64] sm:$0xf]
  %v143 = vld [vmem:[%s0 + $0x68] sm:$0xf]
  %v144 = vld [vmem:[%s0 + $0x6c] sm:$0xf]
  %v145 = vld [vmem:[%s0 + $0x70] sm:$0xf]
  %v146 = vld [vmem:[%s0 + $0x74] sm:$0xf]
  %v147 = vld [vmem:[%s0 + $0x78] sm:$0xf]
  %v148 = vld [vmem:[%s0 + $0x7c] sm:$0xf]
  %v149 = vld [vmem:[%s0 + $0x80] sm:$0xf]
  %v150 = vld [vmem:[%s0 + $0x84] sm:$0xf]
  %v151 = vld [vmem:[%s0 + $0x88] sm:$0xf]
  %v152 = vld [vmem:[%s0 + $0x8c] sm:$0xf]
  %v153 = vld [vmem:[%s0 + $0x90] sm:$0xf]
  %v154 = vld [vmem:[%s0 + $0x94] sm:$0xf]
  %v155 = vld [vmem:[%s0 + $0x98] sm:$0xf]
  %v156 = vld [vmem:[%s0 + $0x9c] sm:$0xf]
  %v157 = vld [vmem:[%s0 + $0xa0] sm:$0xf]
  %v158 = vld [vmem:[%s0 + $0xa4] sm:$0xf]
  %v159 = vld [vmem:[%s0 + $0xa8] sm:$0xf]
  %v160 = vld [vmem:[%s0 + $0xac] sm:$0xf]
  %v161 = vld [vmem:[%s0 + $0xb0] sm:$0xf]
  %v162 = vld [vmem:[%s0 + $0xb4] sm:$0xf]
  %v163 = vld [vmem:[%s0 + $0xb8] sm:$0xf]
  %v164 = vld [vmem:[%s0 + $0xbc] sm:$0xf]
  %v165 = vld [vmem:[%s0 + $0xc0] sm:$0xf]
  %v166 = vld [vmem:[%s1] sm:$0xf]
  %v167 = vld [vmem:[%s1 + $0x4] sm:$0xf]
  %v168 = vld [vmem:[%s1 + $0x8] sm:$0xf]
  %v169 = vld [vmem:[%s1 + $0xc] sm:$0xf]
  %v170 = vld [vmem:[%s1 + $0x10] sm:$0xf]
  %v171 = vld [vmem:[%s1 + $0x14] sm:$0xf]
  %v172 = vld [vmem:[%s1 + $0x18] sm:$0xf]
  %v173 = vld [vmem:[%s1 + $0x1c] sm:$0xf]
  %v174 = vld [vmem:[%s1 + $0x20] sm:$0xf]
  %v175 = vld [vmem:[%s1 + $0x24] sm:$0xf]
  %v176 = vld [vmem:[%s1 + $0x28] sm:$0xf]
  %v177 = vld [vmem:[%s1 + $0x2c] sm:$0xf]
  %v178 = vld [vmem:[%s1 + $0x30] sm:$0xf]
  %v179 = vld [vmem:[%s1 + $0x34] sm:$0xf]
  %v180 = vld [vmem:[%s1 + $0x38] sm:$0xf]
  %v181 = vld [vmem:[%s1 + $0x3c] sm:$0xf]
  %v231 = vunpack.c.l.b16 %v117
  %v232 = vunpack.c.l.b16 %v118
  %v233 = vunpack.c.l.b16 %v119
  %v234 = vunpack.c.l.b16 %v120
  %v235 = vunpack.c.l.b16 %v121
  %v236 = vunpack.c.l.b16 %v122
  %v237 = vunpack.c.l.b16 %v123
  %v238 = vunpack.c.l.b16 %v124
  %v239 = vunpack.c.l.b16 %v125
  %v240 = vunpack.c.l.b16 %v126
  %v241 = vunpack.c.l.b16 %v127
  %v242 = vunpack.c.l.b16 %v128
  %v243 = vunpack.c.l.b16 %v129
  %v244 = vunpack.c.l.b16 %v130
  %v245 = vunpack.c.l.b16 %v131
  %v246 = vunpack.c.l.b16 %v132
  %v247 = vunpack.c.l.b16 %v133
  %v248 = vunpack.c.l.b16 %v134
  %v249 = vunpack.c.l.b16 %v135
  %v250 = vunpack.c.l.b16 %v136
  %v251 = vunpack.c.l.b16 %v137
  %v252 = vunpack.c.l.b16 %v138
  %v253 = vunpack.c.l.b16 %v139
  %v254 = vunpack.c.l.b16 %v140
  %v255 = vunpack.c.l.b16 %v141
  %v256 = vunpack.c.l.b16 %v142
  %v257 = vunpack.c.l.b16 %v143
  %v258 = vunpack.c.l.b16 %v144
  %v259 = vunpack.c.l.b16 %v145
  %v260 = vunpack.c.l.b16 %v146
  %v261 = vunpack.c.l.b16 %v147
  %v262 = vunpack.c.l.b16 %v148
  %v263 = vunpack.c.l.b16 %v149
  %v264 = vunpack.c.l.b16 %v150
  %v265 = vunpack.c.l.b16 %v151
  %v266 = vunpack.c.l.b16 %v152
  %v267 = vunpack.c.l.b16 %v153
  %v268 = vunpack.c.l.b16 %v154
  %v269 = vunpack.c.l.b16 %v155
  %v270 = vunpack.c.l.b16 %v156
  %v271 = vunpack.c.l.b16 %v157
  %v272 = vunpack.c.l.b16 %v158
  %v273 = vunpack.c.l.b16 %v159
  %v274 = vunpack.c.l.b16 %v160
  %v275 = vunpack.c.l.b16 %v161
  %v276 = vunpack.c.l.b16 %v162
  %v277 = vunpack.c.l.b16 %v163
  %v278 = vunpack.c.l.b16 %v164
  %v279 = vunpack.c.l.b16 %v165
  %v280 = vpack.c.b16 %v232, %v231
  %v281 = vpack.c.b16 %v234, %v233
  %v282 = vpack.c.b16 %v236, %v235
  %v283 = vpack.c.b16 %v238, %v237
  %v284 = vpack.c.b16 %v240, %v239
  %v285 = vpack.c.b16 %v242, %v241
  %v286 = vpack.c.b16 %v244, %v243
  %v287 = vpack.c.b16 %v246, %v245
  %v288 = vpack.c.b16 %v248, %v247
  %v289 = vpack.c.b16 %v250, %v249
  %v290 = vpack.c.b16 %v252, %v251
  %v291 = vpack.c.b16 %v254, %v253
  %v292 = vpack.c.b16 %v256, %v255
  %v293 = vpack.c.b16 %v258, %v257
  %v294 = vpack.c.b16 %v260, %v259
  %v295 = vpack.c.b16 %v262, %v261
  %v296 = vpack.c.b16 %v264, %v263
  %v297 = vpack.c.b16 %v266, %v265
  %v298 = vpack.c.b16 %v268, %v267
  %v299 = vpack.c.b16 %v270, %v269
  %v300 = vpack.c.b16 %v272, %v271
  %v301 = vpack.c.b16 %v274, %v273
  %v302 = vpack.c.b16 %v276, %v275
  %v303 = vpack.c.b16 %v278, %v277
  %v304 = vpack.c.b16 %v279, %v279
  %v346 = vunpack.c.l.b16 %v166
  %v347 = vunpack.c.l.b16 %v167
  %v348 = vunpack.c.l.b16 %v168
  %v349 = vunpack.c.l.b16 %v169
  %v350 = vunpack.c.l.b16 %v170
  %v351 = vunpack.c.l.b16 %v171
  %v352 = vunpack.c.l.b16 %v172
  %v353 = vunpack.c.l.b16 %v173
  %v354 = vunpack.c.l.b16 %v174
  %v355 = vunpack.c.l.b16 %v175
  %v356 = vunpack.c.l.b16 %v176
  %v357 = vunpack.c.l.b16 %v177
  %v358 = vunpack.c.l.b16 %v178
  %v359 = vunpack.c.l.b16 %v179
  %v360 = vunpack.c.l.b16 %v180
  %v361 = vunpack.c.l.b16 %v181
  %v362 = vpack.c.b16 %v347, %v346
  %v363 = vpack.c.b16 %v349, %v348
  %v364 = vpack.c.b16 %v351, %v350
  %v365 = vpack.c.b16 %v353, %v352
  %v366 = vpack.c.b16 %v355, %v354
  %v367 = vpack.c.b16 %v357, %v356
  %v368 = vpack.c.b16 %v359, %v358
  %v369 = vpack.c.b16 %v361, %v360
  %378 = vmatprep.subr.bf16.mxu0 0
  %379 = vmatpush1.bf16.msra.mxu0 %v362
  %380 = vmatprep.subr.bf16.mxu0 0
  %381 = vmatpush1.bf16.msra.mxu0 %v363
  %382 = vmatprep.subr.bf16.mxu0 0
  %383 = vmatpush1.bf16.msra.mxu0 %v364
  %384 = vmatprep.subr.bf16.mxu0 0
  %385 = vmatpush1.bf16.msra.mxu0 %v365
  %386 = vmatprep.subr.bf16.mxu0 0
  %387 = vmatpush1.bf16.msra.mxu0 %v366
  %388 = vmatprep.subr.bf16.mxu0 0
  %389 = vmatpush1.bf16.msra.mxu0 %v367
  %390 = vmatprep.subr.bf16.mxu0 0
  %391 = vmatpush1.bf16.msra.mxu0 %v368
  %392 = vmatprep.subr.bf16.mxu0 0
  %393 = vmatpush1.bf16.msra.mxu0 %v369
  %394 = vmatprep.subr.bf16.mxu0 0
  %395 = vmatpush1.bf16.msra.mxu0 0
  %396 = vmatprep.subr.bf16.mxu0 0
  %397 = vmatpush1.bf16.msra.mxu0 0
  %398 = vmatprep.subr.bf16.mxu0 0
  %399 = vmatpush1.bf16.msra.mxu0 0
  %400 = vmatprep.subr.bf16.mxu0 0
  %401 = vmatpush1.bf16.msra.mxu0 0
  %402 = vmatprep.subr.bf16.mxu0 0
  %403 = vmatpush1.bf16.msra.mxu0 0
  %404 = vmatprep.subr.bf16.mxu0 0
  %405 = vmatpush1.bf16.msra.mxu0 0
  %406 = vmatprep.subr.bf16.mxu0 0
  %407 = vmatpush1.bf16.msra.mxu0 0
  %408 = vmatprep.subr.bf16.mxu0 0
  %409 = vmatpush1.bf16.msra.mxu0 0
  %410 = vmatprep.mubr.bf16.mxu0 0
  %411 = vmatmul.mubr.bf16.gmra.mrb[0].mxu0 %v280
  %v412 = vpop.f32.mrb[0].mxu0
  %v413 = vadd.f32 0.0, %v412
  %v414 = vpop.f32.mrb[0].mxu0
  %v415 = vpop.f32.mrb[0].mxu0
  %v416 = vadd.f32 0.0, %v415
  %v417 = vpop.f32.mrb[0].mxu0
  %418 = vmatprep.mubr.bf16.mxu0 0
  %419 = vmatmul.mubr.bf16.gmra.mrb[0].mxu0 %v281
  %v420 = vpop.f32.mrb[0].mxu0
  %v421 = vadd.f32 0.0, %v420
  %v422 = vpop.f32.mrb[0].mxu0
  %v423 = vpop.f32.mrb[0].mxu0
  %v424 = vadd.f32 0.0, %v423
  %v425 = vpop.f32.mrb[0].mxu0
  %426 = vmatprep.mubr.bf16.mxu0 0
  %427 = vmatmul.mubr.bf16.gmra.mrb[0].mxu0 %v282
  %v428 = vpop.f32.mrb[0].mxu0
  %v429 = vadd.f32 0.0, %v428
  %v430 = vpop.f32.mrb[0].mxu0
  %v431 = vpop.f32.mrb[0].mxu0
  %v432 = vadd.f32 0.0, %v431
  %v433 = vpop.f32.mrb[0].mxu0
  %434 = vmatprep.mubr.bf16.mxu0 0
  %435 = vmatmul.mubr.bf16.gmra.mrb[0].mxu0 %v283
  %v436 = vpop.f32.mrb[0].mxu0
  %v437 = vadd.f32 0.0, %v436
  %v438 = vpop.f32.mrb[0].mxu0
  %v439 = vpop.f32.mrb[0].mxu0
  %v440 = vadd.f32 0.0, %v439
  %v441 = vpop.f32.mrb[0].mxu0
  %442 = vmatprep.mubr.bf16.mxu0 0
  %443 = vmatmul.mubr.bf16.gmra.mrb[0].mxu0 %v284
  %v444 = vpop.f32.mrb[0].mxu0
  %v445 = vadd.f32 0.0, %v444
  %v446 = vpop.f32.mrb[0].mxu0
  %v447 = vpop.f32.mrb[0].mxu0
  %v448 = vadd.f32 0.0, %v447
  %v449 = vpop.f32.mrb[0].mxu0
  %450 = vmatprep.mubr.bf16.mxu0 0
  %451 = vmatmul.mubr.bf16.gmra.mrb[0].mxu0 %v285
  %v452 = vpop.f32.mrb[0].mxu0
  %v453 = vadd.f32 0.0, %v452
  %v454 = vpop.f32.mrb[0].mxu0
  %v455 = vpop.f32.mrb[0].mxu0
  %v456 = vadd.f32 0.0, %v455
  %v457 = vpop.f32.mrb[0].mxu0
  %458 = vmatprep.mubr.bf16.mxu0 0
  %459 = vmatmul.mubr.bf16.gmra.mrb[0].mxu0 %v286
  %v460 = vpop.f32.mrb[0].mxu0
  %v461 = vadd.f32 0.0, %v460
  %v462 = vpop.f32.mrb[0].mxu0
  %v463 = vpop.f32.mrb[0].mxu0
  %v464 = vadd.f32 0.0, %v463
  %v465 = vpop.f32.mrb[0].mxu0
  %466 = vmatprep.mubr.bf16.mxu0 0
  %467 = vmatmul.mubr.bf16.gmra.mrb[0].mxu0 %v287
  %v468 = vpop.f32.mrb[0].mxu0
  %v469 = vadd.f32 0.0, %v468
  %v470 = vpop.f32.mrb[0].mxu0
  %v471 = vpop.f32.mrb[0].mxu0
  %v472 = vadd.f32 0.0, %v471
  %v473 = vpop.f32.mrb[0].mxu0
  %474 = vmatprep.mubr.bf16.mxu0 0
  %475 = vmatmul.mubr.bf16.gmra.mrb[0].mxu0 %v288
  %v476 = vpop.f32.mrb[0].mxu0
  %v477 = vadd.f32 0.0, %v476
  %v478 = vpop.f32.mrb[0].mxu0
  %v479 = vpop.f32.mrb[0].mxu0
  %v480 = vadd.f32 0.0, %v479
  %v481 = vpop.f32.mrb[0].mxu0
  %482 = vmatprep.mubr.bf16.mxu0 0
  %483 = vmatmul.mubr.bf16.gmra.mrb[0].mxu0 %v289
  %v484 = vpop.f32.mrb[0].mxu0
  %v485 = vadd.f32 0.0, %v484
  %v486 = vpop.f32.mrb[0].mxu0
  %v487 = vpop.f32.mrb[0].mxu0
  %v488 = vadd.f32 0.0, %v487
  %v489 = vpop.f32.mrb[0].mxu0
  %490 = vmatprep.mubr.bf16.mxu0 0
  %491 = vmatmul.mubr.bf16.gmra.mrb[0].mxu0 %v290
  %v492 = vpop.f32.mrb[0].mxu0
  %v493 = vadd.f32 0.0, %v492
  %v494 = vpop.f32.mrb[0].mxu0
  %v495 = vpop.f32.mrb[0].mxu0
  %v496 = vadd.f32 0.0, %v495
  %v497 = vpop.f32.mrb[0].mxu0
  %498 = vmatprep.mubr.bf16.mxu0 0
  %499 = vmatmul.mubr.bf16.gmra.mrb[0].mxu0 %v291
  %v500 = vpop.f32.mrb[0].mxu0
  %v501 = vadd.f32 0.0, %v500
  %v502 = vpop.f32.mrb[0].mxu0
  %v503 = vpop.f32.mrb[0].mxu0
  %v504 = vadd.f32 0.0, %v503
  %v505 = vpop.f32.mrb[0].mxu0
  %506 = vmatprep.mubr.bf16.mxu0 0
  %507 = vmatmul.mubr.bf16.gmra.mrb[0].mxu0 %v292
  %v508 = vpop.f32.mrb[0].mxu0
  %v509 = vadd.f32 0.0, %v508
  %v510 = vpop.f32.mrb[0].mxu0
  %v511 = vpop.f32.mrb[0].mxu0
  %v512 = vadd.f32 0.0, %v511
  %v513 = vpop.f32.mrb[0].mxu0
  %514 = vmatprep.mubr.bf16.mxu0 0
  %515 = vmatmul.mubr.bf16.gmra.mrb[0].mxu0 %v293
  %v516 = vpop.f32.mrb[0].mxu0
  %v517 = vadd.f32 0.0, %v516
  %v518 = vpop.f32.mrb[0].mxu0
  %v519 = vpop.f32.mrb[0].mxu0
  %v520 = vadd.f32 0.0, %v519
  %v521 = vpop.f32.mrb[0].mxu0
  %522 = vmatprep.mubr.bf16.mxu0 0
  %523 = vmatmul.mubr.bf16.gmra.mrb[0].mxu0 %v294
  %v524 = vpop.f32.mrb[0].mxu0
  %v525 = vadd.f32 0.0, %v524
  %v526 = vpop.f32.mrb[0].mxu0
  %v527 = vpop.f32.mrb[0].mxu0
  %v528 = vadd.f32 0.0, %v527
  %v529 = vpop.f32.mrb[0].mxu0
  %530 = vmatprep.mubr.bf16.mxu0 0
  %531 = vmatmul.mubr.bf16.gmra.mrb[0].mxu0 %v295
  %v532 = vpop.f32.mrb[0].mxu0
  %v533 = vadd.f32 0.0, %v532
  %v534 = vpop.f32.mrb[0].mxu0
  %v535 = vpop.f32.mrb[0].mxu0
  %v536 = vadd.f32 0.0, %v535
  %v537 = vpop.f32.mrb[0].mxu0
  %538 = vmatprep.mubr.bf16.mxu0 0
  %539 = vmatmul.mubr.bf16.gmra.mrb[0].mxu0 %v296
  %v540 = vpop.f32.mrb[0].mxu0
  %v541 = vadd.f32 0.0, %v540
  %v542 = vpop.f32.mrb[0].mxu0
  %v543 = vpop.f32.mrb[0].mxu0
  %v544 = vadd.f32 0.0, %v543
  %v545 = vpop.f32.mrb[0].mxu0
  %546 = vmatprep.mubr.bf16.mxu0 0
  %547 = vmatmul.mubr.bf16.gmra.mrb[0].mxu0 %v297
  %v548 = vpop.f32.mrb[0].mxu0
  %v549 = vadd.f32 0.0, %v548
  %v550 = vpop.f32.mrb[0].mxu0
  %v551 = vpop.f32.mrb[0].mxu0
  %v552 = vadd.f32 0.0, %v551
  %v553 = vpop.f32.mrb[0].mxu0
  %554 = vmatprep.mubr.bf16.mxu0 0
  %555 = vmatmul.mubr.bf16.gmra.mrb[0].mxu0 %v298
  %v556 = vpop.f32.mrb[0].mxu0
  %v557 = vadd.f32 0.0, %v556
  %v558 = vpop.f32.mrb[0].mxu0
  %v559 = vpop.f32.mrb[0].mxu0
  %v560 = vadd.f32 0.0, %v559
  %v561 = vpop.f32.mrb[0].mxu0
  %562 = vmatprep.mubr.bf16.mxu0 0
  %563 = vmatmul.mubr.bf16.gmra.mrb[0].mxu0 %v299
  %v564 = vpop.f32.mrb[0].mxu0
  %v565 = vadd.f32 0.0, %v564
  %v566 = vpop.f32.mrb[0].mxu0
  %v567 = vpop.f32.mrb[0].mxu0
  %v568 = vadd.f32 0.0, %v567
  %v569 = vpop.f32.mrb[0].mxu0
  %570 = vmatprep.mubr.bf16.mxu0 0
  %571 = vmatmul.mubr.bf16.gmra.mrb[0].mxu0 %v300
  %v572 = vpop.f32.mrb[0].mxu0
  %v573 = vadd.f32 0.0, %v572
  %v574 = vpop.f32.mrb[0].mxu0
  %v575 = vpop.f32.mrb[0].mxu0
  %v576 = vadd.f32 0.0, %v575
  %v577 = vpop.f32.mrb[0].mxu0
  %578 = vmatprep.mubr.bf16.mxu0 0
  %579 = vmatmul.mubr.bf16.gmra.mrb[0].mxu0 %v301
  %v580 = vpop.f32.mrb[0].mxu0
  %v581 = vadd.f32 0.0, %v580
  %v582 = vpop.f32.mrb[0].mxu0
  %v583 = vpop.f32.mrb[0].mxu0
  %v584 = vadd.f32 0.0, %v583
  %v585 = vpop.f32.mrb[0].mxu0
  %586 = vmatprep.mubr.bf16.mxu0 0
  %587 = vmatmul.mubr.bf16.gmra.mrb[0].mxu0 %v302
  %v588 = vpop.f32.mrb[0].mxu0
  %v589 = vadd.f32 0.0, %v588
  %v590 = vpop.f32.mrb[0].mxu0
  %v591 = vpop.f32.mrb[0].mxu0
  %v592 = vadd.f32 0.0, %v591
  %v593 = vpop.f32.mrb[0].mxu0
  %594 = vmatprep.mubr.bf16.mxu0 0
  %595 = vmatmul.mubr.bf16.gmra.mrb[0].mxu0 %v303
  %v596 = vpop.f32.mrb[0].mxu0
  %v597 = vadd.f32 0.0, %v596
  %v598 = vpop.f32.mrb[0].mxu0
  %v599 = vpop.f32.mrb[0].mxu0
  %v600 = vadd.f32 0.0, %v599
  %v601 = vpop.f32.mrb[0].mxu0
  %602 = vmatprep.mubr.bf16.mxu0 0
  %603 = vmatmul.mubr.bf16.gmra.mrb[0].mxu0 %v304
  %v604 = vpop.f32.mrb[0].mxu0
  %v605 = vadd.f32 0.0, %v604
  %v606 = vpop.f32.mrb[0].mxu0
  %v607 = vpop.f32.mrb[0].mxu0
  %v608 = vpop.f32.mrb[0].mxu0
  %609 = vdwg.mxu0
  %v610 = vadd.f32 %v68, %v413
  %v611 = vadd.f32 %v69, %v416
  %v612 = vadd.f32 %v70, %v421
  %v613 = vadd.f32 %v71, %v424
  %v614 = vadd.f32 %v72, %v429
  %v615 = vadd.f32 %v73, %v432
  %v616 = vadd.f32 %v74, %v437
  %v617 = vadd.f32 %v75, %v440
  %v618 = vadd.f32 %v76, %v445
  %v619 = vadd.f32 %v77, %v448
  %v620 = vadd.f32 %v78, %v453
  %v621 = vadd.f32 %v79, %v456
  %v622 = vadd.f32 %v80, %v461
  %v623 = vadd.f32 %v81, %v464
  %v624 = vadd.f32 %v82, %v469
  %v625 = vadd.f32 %v83, %v472
  %v626 = vadd.f32 %v84, %v477
  %v627 = vadd.f32 %v85, %v480
  %v628 = vadd.f32 %v86, %v485
  %v629 = vadd.f32 %v87, %v488
  %v630 = vadd.f32 %v88, %v493
  %v631 = vadd.f32 %v89, %v496
  %v632 = vadd.f32 %v90, %v501
  %v633 = vadd.f32 %v91, %v504
  %v634 = vadd.f32 %v92, %v509
  %v635 = vadd.f32 %v93, %v512
  %v636 = vadd.f32 %v94, %v517
  %v637 = vadd.f32 %v95, %v520
  %v638 = vadd.f32 %v96, %v525
  %v639 = vadd.f32 %v97, %v528
  %v640 = vadd.f32 %v98, %v533
  %v641 = vadd.f32 %v99, %v536
  %v642 = vadd.f32 %v100, %v541
  %v643 = vadd.f32 %v101, %v544
  %v644 = vadd.f32 %v102, %v549
  %v645 = vadd.f32 %v103, %v552
  %v646 = vadd.f32 %v104, %v557
  %v647 = vadd.f32 %v105, %v560
  %v648 = vadd.f32 %v106, %v565
  %v649 = vadd.f32 %v107, %v568
  %v650 = vadd.f32 %v108, %v573
  %v651 = vadd.f32 %v109, %v576
  %v652 = vadd.f32 %v110, %v581
  %v653 = vadd.f32 %v111, %v584
  %v654 = vadd.f32 %v112, %v589
  %v655 = vadd.f32 %v113, %v592
  %v656 = vadd.f32 %v114, %v597
  %v657 = vadd.f32 %v115, %v600
  %v658 = vadd.f32 %v116, %v605
  %659 = vst [vmem:[#allocation2] sm:$0xff] %v610
  %660 = vst [vmem:[#allocation2 + $0x8] sm:$0xff] %v611
  %661 = vst [vmem:[#allocation2 + $0x10] sm:$0xff] %v612
  %662 = vst [vmem:[#allocation2 + $0x18] sm:$0xff] %v613
  %663 = vst [vmem:[#allocation2 + $0x20] sm:$0xff] %v614
  %664 = vst [vmem:[#allocation2 + $0x28] sm:$0xff] %v615
  %665 = vst [vmem:[#allocation2 + $0x30] sm:$0xff] %v616
  %666 = vst [vmem:[#allocation2 + $0x38] sm:$0xff] %v617
  %667 = vst [vmem:[#allocation2 + $0x40] sm:$0xff] %v618
  %668 = vst [vmem:[#allocation2 + $0x48] sm:$0xff] %v619
  %669 = vst [vmem:[#allocation2 + $0x50] sm:$0xff] %v620
  %670 = vst [vmem:[#allocation2 + $0x58] sm:$0xff] %v621
  %671 = vst [vmem:[#allocation2 + $0x60] sm:$0xff] %v622
  %672 = vst [vmem:[#allocation2 + $0x68] sm:$0xff] %v623
  %673 = vst [vmem:[#allocation2 + $0x70] sm:$0xff] %v624
  %674 = vst [vmem:[#allocation2 + $0x78] sm:$0xff] %v625
  %675 = vst [vmem:[#allocation2 + $0x80] sm:$0xff] %v626
  %676 = vst [vmem:[#allocation2 + $0x88] sm:$0xff] %v627
  %677 = vst [vmem:[#allocation2 + $0x90] sm:$0xff] %v628
  %678 = vst [vmem:[#allocation2 + $0x98] sm:$0xff] %v629
  %679 = vst [vmem:[#allocation2 + $0xa0] sm:$0xff] %v630
  %680 = vst [vmem:[#allocation2 + $0xa8] sm:$0xff] %v631
  %681 = vst [vmem:[#allocation2 + $0xb0] sm:$0xff] %v632
  %682 = vst [vmem:[#allocation2 + $0xb8] sm:$0xff] %v633
  %683 = vst [vmem:[#allocation2 + $0xc0] sm:$0xff] %v634
  %684 = vst [vmem:[#allocation2 + $0xc8] sm:$0xff] %v635
  %685 = vst [vmem:[#allocation2 + $0xd0] sm:$0xff] %v636
  %686 = vst [vmem:[#allocation2 + $0xd8] sm:$0xff] %v637
  %687 = vst [vmem:[#allocation2 + $0xe0] sm:$0xff] %v638
  %688 = vst [vmem:[#allocation2 + $0xe8] sm:$0xff] %v639
  %689 = vst [vmem:[#allocation2 + $0xf0] sm:$0xff] %v640
  %690 = vst [vmem:[#allocation2 + $0xf8] sm:$0xff] %v641
  %691 = vst [vmem:[#allocation2 + $0x100] sm:$0xff] %v642
  %692 = vst [vmem:[#allocation2 + $0x108] sm:$0xff] %v643
  %693 = vst [vmem:[#allocation2 + $0x110] sm:$0xff] %v644
  %694 = vst [vmem:[#allocation2 + $0x118] sm:$0xff] %v645
  %695 = vst [vmem:[#allocation2 + $0x120] sm:$0xff] %v646
  %696 = vst [vmem:[#allocation2 + $0x128] sm:$0xff] %v647
  %697 = vst [vmem:[#allocation2 + $0x130] sm:$0xff] %v648
  %698 = vst [vmem:[#allocation2 + $0x138] sm:$0xff] %v649
  %699 = vst [vmem:[#allocation2 + $0x140] sm:$0xff] %v650
  %700 = vst [vmem:[#allocation2 + $0x148] sm:$0xff] %v651
  %701 = vst [vmem:[#allocation2 + $0x150] sm:$0xff] %v652
  %702 = vst [vmem:[#allocation2 + $0x158] sm:$0xff] %v653
  %703 = vst [vmem:[#allocation2 + $0x160] sm:$0xff] %v654
  %704 = vst [vmem:[#allocation2 + $0x168] sm:$0xff] %v655
  %705 = vst [vmem:[#allocation2 + $0x170] sm:$0xff] %v656
  %706 = vst [vmem:[#allocation2 + $0x178] sm:$0xff] %v657
  %707 = vst [vmem:[#allocation2 + $0x180] sm:$0xff] %v658
  // Predicated region
  $region18: #{conv2d_rf_forward.1} parent=0 // pred_check
    %p708 = pneg %p15
  $region19: #{conv2d_rf_forward.1} parent=0 // pred_check_branch
    %710 = sbr.rel (%p708) target = $region21
  $region20: #{conv2d_rf_forward.1} parent=0 // pred_region
    %v711 = vld [vmem:[#allocation2] sm:$0xff]
    %v712 = vld [vmem:[#allocation2 + $0x8] sm:$0xff]
    %v713 = vld [vmem:[#allocation2 + $0x10] sm:$0xff]
    %v714 = vld [vmem:[#allocation2 + $0x18] sm:$0xff]
    %v715 = vld [vmem:[#allocation2 + $0x20] sm:$0xff]
    %v716 = vld [vmem:[#allocation2 + $0x28] sm:$0xff]
    %v717 = vld [vmem:[#allocation2 + $0x30] sm:$0xff]
    %v718 = vld [vmem:[#allocation2 + $0x38] sm:$0xff]
    %v719 = vld [vmem:[#allocation2 + $0x40] sm:$0xff]
    %v720 = vld [vmem:[#allocation2 + $0x48] sm:$0xff]
    %v721 = vld [vmem:[#allocation2 + $0x50] sm:$0xff]
    %v722 = vld [vmem:[#allocation2 + $0x58] sm:$0xff]
    %v723 = vld [vmem:[#allocation2 + $0x60] sm:$0xff]
    %v724 = vld [vmem:[#allocation2 + $0x68] sm:$0xff]
    %v725 = vld [vmem:[#allocation2 + $0x70] sm:$0xff]
    %v726 = vld [vmem:[#allocation2 + $0x78] sm:$0xff]
    %v727 = vld [vmem:[#allocation2 + $0x80] sm:$0xff]
    %v728 = vld [vmem:[#allocation2 + $0x88] sm:$0xff]
    %v729 = vld [vmem:[#allocation2 + $0x90] sm:$0xff]
    %v730 = vld [vmem:[#allocation2 + $0x98] sm:$0xff]
    %v731 = vld [vmem:[#allocation2 + $0xa0] sm:$0xff]
    %v732 = vld [vmem:[#allocation2 + $0xa8] sm:$0xff]
    %v733 = vld [vmem:[#allocation2 + $0xb0] sm:$0xff]
    %v734 = vld [vmem:[#allocation2 + $0xb8] sm:$0xff]
    %v735 = vld [vmem:[#allocation2 + $0xc0] sm:$0xff]
    %v736 = vld [vmem:[#allocation2 + $0xc8] sm:$0xff]
    %v737 = vld [vmem:[#allocation2 + $0xd0] sm:$0xff]
    %v738 = vld [vmem:[#allocation2 + $0xd8] sm:$0xff]
    %v739 = vld [vmem:[#allocation2 + $0xe0] sm:$0xff]
    %v740 = vld [vmem:[#allocation2 + $0xe8] sm:$0xff]
    %v741 = vld [vmem:[#allocation2 + $0xf0] sm:$0xff]
    %v742 = vld [vmem:[#allocation2 + $0xf8] sm:$0xff]
    %v743 = vld [vmem:[#allocation2 + $0x100] sm:$0xff]
    %v744 = vld [vmem:[#allocation2 + $0x108] sm:$0xff]
    %v745 = vld [vmem:[#allocation2 + $0x110] sm:$0xff]
    %v746 = vld [vmem:[#allocation2 + $0x118] sm:$0xff]
    %v747 = vld [vmem:[#allocation2 + $0x120] sm:$0xff]
    %v748 = vld [vmem:[#allocation2 + $0x128] sm:$0xff]
    %v749 = vld [vmem:[#allocation2 + $0x130] sm:$0xff]
    %v750 = vld [vmem:[#allocation2 + $0x138] sm:$0xff]
    %v751 = vld [vmem:[#allocation2 + $0x140] sm:$0xff]
    %v752 = vld [vmem:[#allocation2 + $0x148] sm:$0xff]
    %v753 = vld [vmem:[#allocation2 + $0x150] sm:$0xff]
    %v754 = vld [vmem:[#allocation2 + $0x158] sm:$0xff]
    %v755 = vld [vmem:[#allocation2 + $0x160] sm:$0xff]
    %v756 = vld [vmem:[#allocation2 + $0x168] sm:$0xff]
    %v757 = vld [vmem:[#allocation2 + $0x170] sm:$0xff]
    %v758 = vld [vmem:[#allocation2 + $0x178] sm:$0xff]
    %v759 = vld [vmem:[#allocation2 + $0x180] sm:$0xff]
    %v760 = vld [vmem:[%s2] sm:$0x1]
    %v762 = vlaneseq
    %v763 = vshrl.u32 %v762, 7
    %v764 = vsub.s32 0, %v763
    %v765 = vrot.slane %v760, %v764
    %v767 = vadd.f32 %v711, %v765
    %v768 = vadd.f32 %v712, %v765
    %v769 = vadd.f32 %v713, %v765
    %v770 = vadd.f32 %v714, %v765
    %v771 = vadd.f32 %v715, %v765
    %v772 = vadd.f32 %v716, %v765
    %v773 = vadd.f32 %v717, %v765
    %v774 = vadd.f32 %v718, %v765
    %v775 = vadd.f32 %v719, %v765
    %v776 = vadd.f32 %v720, %v765
    %v777 = vadd.f32 %v721, %v765
    %v778 = vadd.f32 %v722, %v765
    %v779 = vadd.f32 %v723, %v765
    %v780 = vadd.f32 %v724, %v765
    %v781 = vadd.f32 %v725, %v765
    %v782 = vadd.f32 %v726, %v765
    %v783 = vadd.f32 %v727, %v765
    %v784 = vadd.f32 %v728, %v765
    %v785 = vadd.f32 %v729, %v765
    %v786 = vadd.f32 %v730, %v765
    %v787 = vadd.f32 %v731, %v765
    %v788 = vadd.f32 %v732, %v765
    %v789 = vadd.f32 %v733, %v765
    %v790 = vadd.f32 %v734, %v765
    %v791 = vadd.f32 %v735, %v765
    %v792 = vadd.f32 %v736, %v765
    %v793 = vadd.f32 %v737, %v765
    %v794 = vadd.f32 %v738, %v765
    %v795 = vadd.f32 %v739, %v765
    %v796 = vadd.f32 %v740, %v765
    %v797 = vadd.f32 %v741, %v765
    %v798 = vadd.f32 %v742, %v765
    %v799 = vadd.f32 %v743, %v765
    %v800 = vadd.f32 %v744, %v765
    %v801 = vadd.f32 %v745, %v765
    %v802 = vadd.f32 %v746, %v765
    %v803 = vadd.f32 %v747, %v765
    %v804 = vadd.f32 %v748, %v765
    %v805 = vadd.f32 %v749, %v765
    %v806 = vadd.f32 %v750, %v765
    %v807 = vadd.f32 %v751, %v765
    %v808 = vadd.f32 %v752, %v765
    %v809 = vadd.f32 %v753, %v765
    %v810 = vadd.f32 %v754, %v765
    %v811 = vadd.f32 %v755, %v765
    %v812 = vadd.f32 %v756, %v765
    %v813 = vadd.f32 %v757, %v765
    %v814 = vadd.f32 %v758, %v765
    %v815 = vadd.f32 %v759, %v765
    %816 = vst [vmem:[%s3] sm:$0xff] %v767
    %817 = vst [vmem:[%s3 + $0x8] sm:$0xff] %v768
    %818 = vst [vmem:[%s3 + $0x10] sm:$0xff] %v769
    %819 = vst [vmem:[%s3 + $0x18] sm:$0xff] %v770
    %820 = vst [vmem:[%s3 + $0x20] sm:$0xff] %v771
    %821 = vst [vmem:[%s3 + $0x28] sm:$0xff] %v772
    %822 = vst [vmem:[%s3 + $0x30] sm:$0xff] %v773
    %823 = vst [vmem:[%s3 + $0x38] sm:$0xff] %v774
    %824 = vst [vmem:[%s3 + $0x40] sm:$0xff] %v775
    %825 = vst [vmem:[%s3 + $0x48] sm:$0xff] %v776
    %826 = vst [vmem:[%s3 + $0x50] sm:$0xff] %v777
    %827 = vst [vmem:[%s3 + $0x58] sm:$0xff] %v778
    %828 = vst [vmem:[%s3 + $0x60] sm:$0xff] %v779
    %829 = vst [vmem:[%s3 + $0x68] sm:$0xff] %v780
    %830 = vst [vmem:[%s3 + $0x70] sm:$0xff] %v781
    %831 = vst [vmem:[%s3 + $0x78] sm:$0xff] %v782
    %832 = vst [vmem:[%s3 + $0x80] sm:$0xff] %v783
    %833 = vst [vmem:[%s3 + $0x88] sm:$0xff] %v784
    %834 = vst [vmem:[%s3 + $0x90] sm:$0xff] %v785
    %835 = vst [vmem:[%s3 + $0x98] sm:$0xff] %v786
    %836 = vst [vmem:[%s3 + $0xa0] sm:$0xff] %v787
    %837 = vst [vmem:[%s3 + $0xa8] sm:$0xff] %v788
    %838 = vst [vmem:[%s3 + $0xb0] sm:$0xff] %v789
    %839 = vst [vmem:[%s3 + $0xb8] sm:$0xff] %v790
    %840 = vst [vmem:[%s3 + $0xc0] sm:$0xff] %v791
    %841 = vst [vmem:[%s3 + $0xc8] sm:$0xff] %v792
    %842 = vst [vmem:[%s3 + $0xd0] sm:$0xff] %v793
    %843 = vst [vmem:[%s3 + $0xd8] sm:$0xff] %v794
    %844 = vst [vmem:[%s3 + $0xe0] sm:$0xff] %v795
    %845 = vst [vmem:[%s3 + $0xe8] sm:$0xff] %v796
    %846 = vst [vmem:[%s3 + $0xf0] sm:$0xff] %v797
    %847 = vst [vmem:[%s3 + $0xf8] sm:$0xff] %v798
    %848 = vst [vmem:[%s3 + $0x100] sm:$0xff] %v799
    %849 = vst [vmem:[%s3 + $0x108] sm:$0xff] %v800
    %850 = vst [vmem:[%s3 + $0x110] sm:$0xff] %v801
    %851 = vst [vmem:[%s3 + $0x118] sm:$0xff] %v802
    %852 = vst [vmem:[%s3 + $0x120] sm:$0xff] %v803
    %853 = vst [vmem:[%s3 + $0x128] sm:$0xff] %v804
    %854 = vst [vmem:[%s3 + $0x130] sm:$0xff] %v805
    %855 = vst [vmem:[%s3 + $0x138] sm:$0xff] %v806
    %856 = vst [vmem:[%s3 + $0x140] sm:$0xff] %v807
    %857 = vst [vmem:[%s3 + $0x148] sm:$0xff] %v808
    %858 = vst [vmem:[%s3 + $0x150] sm:$0xff] %v809
    %859 = vst [vmem:[%s3 + $0x158] sm:$0xff] %v810
    %860 = vst [vmem:[%s3 + $0x160] sm:$0xff] %v811
    %861 = vst [vmem:[%s3 + $0x168] sm:$0xff] %v812
    %862 = vst [vmem:[%s3 + $0x170] sm:$0xff] %v813
    %863 = vst [vmem:[%s3 + $0x178] sm:$0xff] %v814
    %864 = vst [vmem:[%s3 + $0x180] sm:$0xff] %v815
  $region21: #{conv2d_rf_forward.1} parent=0 // pred_fallthru
    _
  // Predicated region
  $region22: #{conv2d_rf_forward.1} parent=0 // pred_check
    _
  $region23: #{conv2d_rf_forward.1} parent=0 // pred_check_branch
    %866 = sbr.rel (0) target = $region25
  $region24: #{conv2d_rf_forward.1} parent=0 // pred_region
    _
  $region25: #{conv2d_rf_forward.1} parent=0 // pred_fallthru
    _
  // Predicated region
  $region26: #{conv2d_rf_forward.1} parent=0 // pred_check
    _
  $region27: #{conv2d_rf_forward.1} parent=0 // pred_check_branch
    %868 = sbr.rel (0) target = $region29
  $region28: #{conv2d_rf_forward.1} parent=0 // pred_region
    _
  $region29: #{conv2d_rf_forward.1} parent=0 // pred_fallthru
    _

</llo_original>
